<compile_context>
chip_gen: v7x
topology: tpu7x:2x2x1
jax: 0.10.0
libtpu: 0.0.40
codegen_flags: <defaults>
</compile_context>

<pallas_src>
import jax
import jax.numpy as jnp
from jax.experimental import pallas as pl
from jax.experimental.pallas import tpu as pltpu

HIDDEN = 64    # logical hidden width (matches nn.Linear(*, 64))
LANE = 128     # TPU lane width; hidden channels are zero-padded to this


def _actor_kernel(x_ref, w1_ref, b1_ref, w2_ref, b2_ref, w3_ref, b3_ref, o_ref):
    # x: (TB, in_dim) f32 tile; weights bf16 (padded to 128 lanes); biases f32.
    # In-kernel f32 -> bf16 cast (cheap VPU work hidden under the tile DMAs).
    x = x_ref[...].astype(jnp.bfloat16)
    h1 = jnp.dot(x, w1_ref[...], preferred_element_type=jnp.float32)
    h1 = jnp.maximum(h1 + b1_ref[...], 0.0)                       # f32 elementwise
    h2 = jnp.dot(h1.astype(jnp.bfloat16), w2_ref[...],
                 preferred_element_type=jnp.float32)
    h2 = jnp.maximum(h2 + b2_ref[...], 0.0)
    logits = jnp.dot(h2.astype(jnp.bfloat16), w3_ref[...],
                     preferred_element_type=jnp.float32)          # (TB, 128)
    out_dim = o_ref.shape[-1]
    # Narrow store: only the real logit columns go back to HBM (~32x fewer bytes
    # than the old lane-padded f32 slab).
    o_ref[...] = logits[:, :out_dim] + b3_ref[...]


def _round_up(x, m):
    return (x + m - 1) // m * m


def _resident(a):
    """VMEM-resident operand: same (0,...) block for every grid step."""
    nd = a.ndim
    return pl.BlockSpec(a.shape, lambda i: (0,) * nd)


def prepare_actor_params(params):
    """One-time padding / casting of the Actor weights (hoisted off the per-call
    critical path).  Weights are stored (in, out), i.e. torch W.T."""
    w1, b1 = params["w1"], params["b1"]
    w2, b2 = params["w2"], params["b2"]
    w3, b3 = params["w3"], params["b3"]
    hidden = w1.shape[1]
    out_dim = w3.shape[1]
    assert hidden <= LANE and out_dim <= LANE, (
        "hidden/out_dim must be <= 128 for the lane-padding scheme")

    def pad_cols(a, n):
        return jnp.pad(a, ((0, 0), (0, n - a.shape[1])))

    return {
        "w1p": pad_cols(w1, LANE).astype(jnp.bfloat16),                      # (in, 128)
        "b1p": pad_cols(b1, LANE).astype(jnp.float32),                       # (1, 128)
        "w2p": jnp.pad(w2, ((0, LANE - w2.shape[0]),
                            (0, LANE - w2.shape[1]))).astype(jnp.bfloat16),  # (128, 128)
        "b2p": pad_cols(b2, LANE).astype(jnp.float32),                       # (1, 128)
        "w3p": jnp.pad(w3, ((0, LANE - w3.shape[0]),
                            (0, LANE - w3.shape[1]))).astype(jnp.bfloat16),  # (128, 128)
        "b3":  b3.astype(jnp.float32),                                       # (1, out)
    }


def actor_forward(state, prepared, *, block_rows=8192):
    """Fused 3-layer MLP forward pass.

    state    : (B, in_dim) float32
    prepared : dict from prepare_actor_params()
    returns (B, out_dim) float32 logits.

    Numerics: bf16 operands on the MXU with f32 accumulation (~1e-2 relative
    error vs the f32 torch Actor -- fine for PPO logits).
    """
    w1p, b1p = prepared["w1p"], prepared["b1p"]
    w2p, b2p = prepared["w2p"], prepared["b2p"]
    w3p, b3 = prepared["w3p"], prepared["b3"]

    B, in_dim = state.shape
    assert in_dim == w1p.shape[0], "state feature dim does not match w1"
    out_dim = b3.shape[1]

    # Tiny-batch edge case only: pad up to one sublane tile (8 rows).
    x, B_eff = state, B
    if B < 8:
        x = jnp.pad(state, ((0, 8 - B), (0, 0)))
        B_eff = 8

    # ---- batch tiling -------------------------------------------------------
    # VMEM budget (~24 MiB of the 32 MiB scoped limit; v7x physical is 64 MiB):
    # double-buffered f32 input + f32 intermediates (h1/h2/logits) + d-b output.
    row_bytes = 2 * 4 * in_dim + 3 * 4 * LANE + 2 * 4 * out_dim
    vmem_cap_rows = max(8, ((24 << 20) // row_bytes) // 8 * 8)

    tb = min(block_rows, vmem_cap_rows, (B_eff // 8) * 8)   # multiple of 8, <= B_eff
    if B_eff >= 32:
        # Guarantee >= 2 grid steps so ("parallel",) can shard across both
        # v7x TensorCores (and keep the pipeline's prefetch/writeback overlap).
        tb = min(tb, _round_up(pl.cdiv(B_eff, 2), 8))
    tb = max(tb, 8)
    num_tiles = pl.cdiv(B_eff, tb)        # ragged tail handled by masked last tile

    rows = num_tiles * tb
    flops = 2 * rows * (in_dim * LANE + LANE * LANE + LANE * LANE)
    bytes_accessed = (rows * in_dim * 4 + rows * out_dim * 4
                      + (w1p.size + w2p.size + w3p.size) * 2
                      + (b1p.size + b2p.size + b3.size) * 4)

    out = pl.pallas_call(
        _actor_kernel,
        out_shape=jax.ShapeDtypeStruct((B_eff, out_dim), jnp.float32),
        grid=(num_tiles,),
        in_specs=[pl.BlockSpec((tb, in_dim), lambda i: (i, 0)),   # pipelined tiles
                  _resident(w1p), _resident(b1p),
                  _resident(w2p), _resident(b2p),
                  _resident(w3p), _resident(b3)],
        out_specs=pl.BlockSpec((tb, out_dim), lambda i: (i, 0)),  # narrow writeback
        compiler_params=pltpu.CompilerParams(
            dimension_semantics=("parallel",),     # megacore shard on v7x
            vmem_limit_bytes=32 << 20),            # safe on v5e/v6e/v7x (64 MiB phys)
        cost_estimate=pl.CostEstimate(flops=flops, transcendentals=0,
                                      bytes_accessed=bytes_accessed),
    )(x, w1p, b1p, w2p, b2p, w3p, b3)

    return out if B_eff == B else out[:B]


def init_actor_params(key, in_dim, out_dim, hidden=HIDDEN):
    """Deterministic init mimicking torch.nn.Linear default (U[-1/sqrt(fan_in), +])."""
    ks = jax.random.split(key, 6)

    def linear(kw, kb, fan_in, fan_out):
        bound = 1.0 / jnp.sqrt(jnp.asarray(fan_in, jnp.float32))
        w = jax.random.uniform(kw, (fan_in, fan_out), jnp.float32, -bound, bound)
        b = jax.random.uniform(kb, (1, fan_out), jnp.float32, -bound, bound)
        return w, b

    w1, b1 = linear(ks[0], ks[1], in_dim, hidden)
    w2, b2 = linear(ks[2], ks[3], hidden, hidden)
    w3, b3 = linear(ks[4], ks[5], hidden, out_dim)
    return {"w1": w1, "b1": b1, "w2": w2, "b2": b2, "w3": w3, "b3": b3}


def actor_forward_ref(state, params):
    """Pure-JAX f32 reference for correctness checking."""
    h1 = jnp.maximum(state @ params["w1"] + params["b1"], 0.0)
    h2 = jnp.maximum(h1 @ params["w2"] + params["b2"], 0.0)
    return h2 @ params["w3"] + params["b3"]


if __name__ == "__main__":
    key = jax.random.PRNGKey(0)
    k_param, k_state = jax.random.split(key)

    in_dim, out_dim, batch = 8, 4, 8
    params = init_actor_params(k_param, in_dim, out_dim)
    prepared = prepare_actor_params(params)          # one-time pad/cast (hoisted)
    state = jax.random.normal(k_state, (batch, in_dim), jnp.float32)

    out = actor_forward(state, prepared)
    out = jax.block_until_ready(out)

    ref = actor_forward_ref(state, params)
    assert out.shape == (batch, out_dim)
    # bf16 MXU inputs with f32 accumulation -> small quantization error vs f32 ref.
    assert jnp.allclose(out, ref, atol=3e-2, rtol=3e-2)

    print("KERNEL_OK")
</pallas_src>

<mosaic_0001>
module attributes {stable_mosaic.version = 11 : i64} {
  func.func @_actor_kernel(%arg0: i32, %arg1: memref<8x8xf32, #tpu.memory_space<vmem>>, %arg2: memref<8x128xbf16, #tpu.memory_space<vmem>>, %arg3: memref<1x128xf32, #tpu.memory_space<vmem>>, %arg4: memref<128x128xbf16, #tpu.memory_space<vmem>>, %arg5: memref<1x128xf32, #tpu.memory_space<vmem>>, %arg6: memref<128x128xbf16, #tpu.memory_space<vmem>>, %arg7: memref<1x4xf32, #tpu.memory_space<vmem>>, %arg8: memref<8x4xf32, #tpu.memory_space<vmem>>) attributes {dimension_semantics = [#tpu.dimension_semantics<parallel>], iteration_bounds = array<i64: 1>, scalar_prefetch = 0 : i64, scratch_operands = 0 : i64, tpu.core_type = #tpu.core_type<tc>, window_params = [{transform_indices = @transform_0, window_bounds = array<i64: 8, 8>}, {pipeline_mode = #tpu.pipeline_mode<synchronous>, transform_indices = @transform_1, window_bounds = array<i64: 8, 128>}, {pipeline_mode = #tpu.pipeline_mode<synchronous>, transform_indices = @transform_2, window_bounds = array<i64: 1, 128>}, {pipeline_mode = #tpu.pipeline_mode<synchronous>, transform_indices = @transform_3, window_bounds = array<i64: 128, 128>}, {pipeline_mode = #tpu.pipeline_mode<synchronous>, transform_indices = @transform_4, window_bounds = array<i64: 1, 128>}, {pipeline_mode = #tpu.pipeline_mode<synchronous>, transform_indices = @transform_5, window_bounds = array<i64: 128, 128>}, {pipeline_mode = #tpu.pipeline_mode<synchronous>, transform_indices = @transform_6, window_bounds = array<i64: 1, 4>}, {transform_indices = @transform_7, window_bounds = array<i64: 8, 4>}]} {
    %c0 = arith.constant 0 : index
    %c0_0 = arith.constant 0 : index
    %0 = vector.load %arg1[%c0, %c0_0] : memref<8x8xf32, #tpu.memory_space<vmem>>, vector<8x8xf32>
    %1 = arith.truncf %0 : vector<8x8xf32> to vector<8x8xbf16>
    %c0_1 = arith.constant 0 : index
    %c0_2 = arith.constant 0 : index
    %2 = vector.load %arg2[%c0_1, %c0_2] : memref<8x128xbf16, #tpu.memory_space<vmem>>, vector<8x128xbf16>
    %cst = arith.constant dense<0.000000e+00> : vector<8x128xf32>
    %3 = tpu.matmul %1, %2, %cst {dimension_numbers = #tpu.dot_dimension_numbers<[1], [0], [0], [1], [0, 0, 1, 1], [], []>} : vector<8x8xbf16>, vector<8x128xbf16>, vector<8x128xf32> -> vector<8x128xf32>
    %c0_3 = arith.constant 0 : index
    %c0_4 = arith.constant 0 : index
    %4 = vector.load %arg3[%c0_3, %c0_4] : memref<1x128xf32, #tpu.memory_space<vmem>>, vector<1x128xf32>
    %5 = vector.broadcast %4 : vector<1x128xf32> to vector<8x128xf32>
    %6 = arith.addf %3, %5 : vector<8x128xf32>
    %cst_5 = arith.constant 0.000000e+00 : f32
    %7 = vector.broadcast %cst_5 : f32 to vector<8x128xf32>
    %8 = arith.maximumf %6, %7 : vector<8x128xf32>
    %9 = arith.truncf %8 : vector<8x128xf32> to vector<8x128xbf16>
    %c0_6 = arith.constant 0 : index
    %c0_7 = arith.constant 0 : index
    %10 = vector.load %arg4[%c0_6, %c0_7] : memref<128x128xbf16, #tpu.memory_space<vmem>>, vector<128x128xbf16>
    %cst_8 = arith.constant dense<0.000000e+00> : vector<8x128xf32>
    %11 = tpu.matmul %9, %10, %cst_8 {dimension_numbers = #tpu.dot_dimension_numbers<[1], [0], [0], [1], [0, 0, 1, 1], [], []>} : vector<8x128xbf16>, vector<128x128xbf16>, vector<8x128xf32> -> vector<8x128xf32>
    %c0_9 = arith.constant 0 : index
    %c0_10 = arith.constant 0 : index
    %12 = vector.load %arg5[%c0_9, %c0_10] : memref<1x128xf32, #tpu.memory_space<vmem>>, vector<1x128xf32>
    %13 = vector.broadcast %12 : vector<1x128xf32> to vector<8x128xf32>
    %14 = arith.addf %11, %13 : vector<8x128xf32>
    %cst_11 = arith.constant 0.000000e+00 : f32
    %15 = vector.broadcast %cst_11 : f32 to vector<8x128xf32>
    %16 = arith.maximumf %14, %15 : vector<8x128xf32>
    %17 = arith.truncf %16 : vector<8x128xf32> to vector<8x128xbf16>
    %c0_12 = arith.constant 0 : index
    %c0_13 = arith.constant 0 : index
    %18 = vector.load %arg6[%c0_12, %c0_13] : memref<128x128xbf16, #tpu.memory_space<vmem>>, vector<128x128xbf16>
    %cst_14 = arith.constant dense<0.000000e+00> : vector<8x128xf32>
    %19 = tpu.matmul %17, %18, %cst_14 {dimension_numbers = #tpu.dot_dimension_numbers<[1], [0], [0], [1], [0, 0, 1, 1], [], []>} : vector<8x128xbf16>, vector<128x128xbf16>, vector<8x128xf32> -> vector<8x128xf32>
    %20 = vector.extract_strided_slice %19 {offsets = [0, 0], sizes = [8, 4], strides = [1, 1]} : vector<8x128xf32> to vector<8x4xf32>
    %c0_15 = arith.constant 0 : index
    %c0_16 = arith.constant 0 : index
    %21 = vector.load %arg7[%c0_15, %c0_16] : memref<1x4xf32, #tpu.memory_space<vmem>>, vector<1x4xf32>
    %22 = vector.broadcast %21 : vector<1x4xf32> to vector<8x4xf32>
    %23 = arith.addf %20, %22 : vector<8x4xf32>
    %c0_17 = arith.constant 0 : index
    %c0_18 = arith.constant 0 : index
    %24 = vector.load %arg8[%c0_17, %c0_18] : memref<8x4xf32, #tpu.memory_space<vmem>>, vector<8x4xf32>
    tpu.vector_store %arg8[%c0_17, %c0_18], %23 {strides = array<i32>} : memref<8x4xf32, #tpu.memory_space<vmem>>, vector<8x4xf32>,
    return
  }
  func.func @transform_0(%arg0: i32) -> (i32, i32) {
    %c0_i32 = arith.constant 0 : i32
    %c0_i32_0 = arith.constant 0 : i32
    return %arg0, %c0_i32 : i32, i32
  }
  func.func @transform_1(%arg0: i32) -> (i32, i32) {
    %c0_i32 = arith.constant 0 : i32
    %c0_i32_0 = arith.constant 0 : i32
    %c0_i32_1 = arith.constant 0 : i32
    return %c0_i32, %c0_i32_0 : i32, i32
  }
  func.func @transform_2(%arg0: i32) -> (i32, i32) {
    %c0_i32 = arith.constant 0 : i32
    %c0_i32_0 = arith.constant 0 : i32
    %c0_i32_1 = arith.constant 0 : i32
    return %c0_i32, %c0_i32_0 : i32, i32
  }
  func.func @transform_3(%arg0: i32) -> (i32, i32) {
    %c0_i32 = arith.constant 0 : i32
    %c0_i32_0 = arith.constant 0 : i32
    %c0_i32_1 = arith.constant 0 : i32
    return %c0_i32, %c0_i32_0 : i32, i32
  }
  func.func @transform_4(%arg0: i32) -> (i32, i32) {
    %c0_i32 = arith.constant 0 : i32
    %c0_i32_0 = arith.constant 0 : i32
    %c0_i32_1 = arith.constant 0 : i32
    return %c0_i32, %c0_i32_0 : i32, i32
  }
  func.func @transform_5(%arg0: i32) -> (i32, i32) {
    %c0_i32 = arith.constant 0 : i32
    %c0_i32_0 = arith.constant 0 : i32
    %c0_i32_1 = arith.constant 0 : i32
    return %c0_i32, %c0_i32_0 : i32, i32
  }
  func.func @transform_6(%arg0: i32) -> (i32, i32) {
    %c0_i32 = arith.constant 0 : i32
    %c0_i32_0 = arith.constant 0 : i32
    %c0_i32_1 = arith.constant 0 : i32
    return %c0_i32, %c0_i32_0 : i32, i32
  }
  func.func @transform_7(%arg0: i32) -> (i32, i32) {
    %c0_i32 = arith.constant 0 : i32
    %c0_i32_0 = arith.constant 0 : i32
    return %arg0, %c0_i32 : i32, i32
  }
}

</mosaic_0001>

<llo_original>
// kernel: tpu_custom_call.1
$region0: #{tpu_custom_call.1}
  #allocation0 [shape = 'u32[]', space=smem, size = 0x4, offset = 0x4, fixed_abs, tag = 'smem constant byte address 0x4 - core index']
  #allocation1 [shape = 'u32[144,128]{1,0:T(1,128)}', space=vmem, size = 0x12000, scoped, tag = 'internal scratch']
  %s0 = inlined_call_operand.hbm [shape: f32[8,8], index: 0, kind: input, shape index: {}]
  %s1 = inlined_call_operand.hbm [shape: bf16[8,128], index: 1, kind: input, shape index: {}]
  %s2 = inlined_call_operand.vmem [shape: f32[1,128], index: 2, kind: input, shape index: {}]
  %s3 = inlined_call_operand.hbm [shape: bf16[128,128], index: 3, kind: input, shape index: {}]
  %s4 = inlined_call_operand.vmem [shape: f32[1,128], index: 4, kind: input, shape index: {}]
  %s5 = inlined_call_operand.hbm [shape: bf16[128,128], index: 5, kind: input, shape index: {}]
  %s6 = inlined_call_operand.vmem [shape: f32[1,4], index: 6, kind: input, shape index: {}]
  %s7 = inlined_call_operand.vmem [shape: f32[8,4], index: 7, kind: output, shape index: {}]
  %s8 = sld [smem:[#allocation0]]
  $region54: #{tpu_custom_call.1} parent=0
    _
  %s10 = ssub.s32 1, %s8
  %s11 = scalar_select 0, %s10, %s8
  $region1: #{tpu_custom_call.1} parent=0
    #allocation2 [shape = 'u8[4096]{0}', space=vmem, size = 0x1000, scoped, tag = 'input window, operand 0, single buffered']
    #allocation3 [shape = 's32[1]{0}', space=sflag, size = 0x4, scoped, tag = 'scoped memory for tpu_custom_call.1']
    #allocation4 [shape = 'u8[2048]{0}', space=vmem, size = 0x800, scoped, tag = 'input window, operand 1, single buffered']
    #allocation5 [shape = 's32[1]{0}', space=sflag, size = 0x4, scoped, tag = 'scoped memory for tpu_custom_call.1']
    #allocation6 [shape = 'u8[32768]{0}', space=vmem, size = 0x8000, scoped, tag = 'input window, operand 3, single buffered']
    #allocation7 [shape = 'u8[32768]{0}', space=vmem, size = 0x8000, scoped, tag = 'input window, operand 5, single buffered']
    #allocation8 [shape = 's32[1]{0}', space=sflag, size = 0x4, scoped, tag = 'scoped memory for tpu_custom_call.1']
    %12 = vsyncpa [#allocation3], 0
    %13 = vsyncpa [#allocation5], 0
    %14 = vsyncpa [#allocation8], 0
    // Predicated region
    $region2: #{tpu_custom_call.1} parent=1 // pred_check
      _
    $region3: #{tpu_custom_call.1} parent=1 // pred_check_branch
      %16 = sbr.rel (0) target = $region5
    $region4: #{tpu_custom_call.1} parent=1 // pred_region
      %s18 = ssub.s32 128, 128
      %19 = vsyncadd [#allocation3], %s18
      %s21 = sshll.u32 [#allocation2], 4
      %s22 = int_to_ptr.vmem [resolvable:$true] %s21
      %24 = dma.hbm_to_vmem [thread:$0]  %s0, 128, %s22, [#allocation3]
    $region5: #{tpu_custom_call.1} parent=1 // pred_fallthru
      _
    // Predicated region
    $region6: #{tpu_custom_call.1} parent=1 // pred_check
      _
    $region7: #{tpu_custom_call.1} parent=1 // pred_check_branch
      %26 = sbr.rel (0) target = $region9
    $region8: #{tpu_custom_call.1} parent=1 // pred_region
      %s28 = ssub.s32 64, 64
      %29 = vsyncadd [#allocation5], %s28
      %s31 = sshll.u32 [#allocation4], 4
      %s32 = int_to_ptr.vmem [resolvable:$true] %s31
      %34 = dma.hbm_to_vmem [thread:$0]  %s1, 64, %s32, [#allocation5]
    $region9: #{tpu_custom_call.1} parent=1 // pred_fallthru
      _
    // Predicated region
    $region10: #{tpu_custom_call.1} parent=1 // pred_check
      _
    $region11: #{tpu_custom_call.1} parent=1 // pred_check_branch
      %36 = sbr.rel (0) target = $region13
    $region12: #{tpu_custom_call.1} parent=1 // pred_region
      _
    $region13: #{tpu_custom_call.1} parent=1 // pred_fallthru
      _
    // Predicated region
    $region14: #{tpu_custom_call.1} parent=1 // pred_check
      _
    $region15: #{tpu_custom_call.1} parent=1 // pred_check_branch
      %38 = sbr.rel (0) target = $region17
    $region16: #{tpu_custom_call.1} parent=1 // pred_region
      %s40 = ssub.s32 1024, 1024
      %41 = vsyncadd [#allocation5], %s40
      %s42 = sshll.u32 [#allocation6], 4
      %s43 = int_to_ptr.vmem [resolvable:$true] %s42
      %48 = dma.hbm_to_vmem [thread:$0]  %s3, 1024, %s43, [#allocation5], 64, 64, 4
    $region17: #{tpu_custom_call.1} parent=1 // pred_fallthru
      _
    // Predicated region
    $region18: #{tpu_custom_call.1} parent=1 // pred_check
      _
    $region19: #{tpu_custom_call.1} parent=1 // pred_check_branch
      %50 = sbr.rel (0) target = $region21
    $region20: #{tpu_custom_call.1} parent=1 // pred_region
      _
    $region21: #{tpu_custom_call.1} parent=1 // pred_fallthru
      _
    // Predicated region
    $region22: #{tpu_custom_call.1} parent=1 // pred_check
      _
    $region23: #{tpu_custom_call.1} parent=1 // pred_check_branch
      %52 = sbr.rel (0) target = $region25
    $region24: #{tpu_custom_call.1} parent=1 // pred_region
      %s54 = ssub.s32 1024, 1024
      %55 = vsyncadd [#allocation8], %s54
      %s56 = sshll.u32 [#allocation7], 4
      %s57 = int_to_ptr.vmem [resolvable:$true] %s56
      %62 = dma.hbm_to_vmem [thread:$0]  %s5, 1024, %s57, [#allocation8], 64, 64, 4
    $region25: #{tpu_custom_call.1} parent=1 // pred_fallthru
      _
    // Predicated region
    $region26: #{tpu_custom_call.1} parent=1 // pred_check
      _
    $region27: #{tpu_custom_call.1} parent=1 // pred_check_branch
      %64 = sbr.rel (0) target = $region29
    $region28: #{tpu_custom_call.1} parent=1 // pred_region
      _
    $region29: #{tpu_custom_call.1} parent=1 // pred_fallthru
      _
    // Predicated region
    $region30: #{tpu_custom_call.1} parent=1 // pred_check
      _
    $region31: #{tpu_custom_call.1} parent=1 // pred_check_branch
      %66 = sbr.rel (0) target = $region33
    $region32: #{tpu_custom_call.1} parent=1 // pred_region
      %67 = dma.done [#allocation3], 128
    $region33: #{tpu_custom_call.1} parent=1 // pred_fallthru
      _
    // Predicated region
    $region34: #{tpu_custom_call.1} parent=1 // pred_check
      _
    $region35: #{tpu_custom_call.1} parent=1 // pred_check_branch
      %69 = sbr.rel (0) target = $region37
    $region36: #{tpu_custom_call.1} parent=1 // pred_region
      %70 = dma.done [#allocation5], 64
    $region37: #{tpu_custom_call.1} parent=1 // pred_fallthru
      _
    // Predicated region
    $region38: #{tpu_custom_call.1} parent=1 // pred_check
      _
    $region39: #{tpu_custom_call.1} parent=1 // pred_check_branch
      %72 = sbr.rel (0) target = $region41
    $region40: #{tpu_custom_call.1} parent=1 // pred_region
      %73 = dma.done [#allocation5], 1024
    $region41: #{tpu_custom_call.1} parent=1 // pred_fallthru
      _
    // Predicated region
    $region42: #{tpu_custom_call.1} parent=1 // pred_check
      _
    $region43: #{tpu_custom_call.1} parent=1 // pred_check_branch
      %75 = sbr.rel (0) target = $region45
    $region44: #{tpu_custom_call.1} parent=1 // pred_region
      %76 = dma.done [#allocation8], 1024
    $region45: #{tpu_custom_call.1} parent=1 // pred_fallthru
      _
    %v78 = vld [vmem:[#allocation2] sm:$0xff]
    %v79 = vpack.c.bf16 %v78, %v78
    %v80 = vld [vmem:[#allocation4] sm:$0xf]
    %v81 = vld [vmem:[%s2] sm:$0x1]
    %v83 = vlaneseq
    %v84 = vshrl.u32 %v83, 7
    %v85 = vsub.s32 0, %v84
    %v86 = vrot.slane %v81, %v85
    %vm88 = vcmask 64512
    %v90 = vsel %vm88, %v79, 0
    %vm92 = vcmask 1043456
    %v94 = vsel %vm92, %v80, 0
    %96 = vmatprep.subr.bf16.mxu0 0
    %97 = vmatpush1.bf16.msra.mxu0 %v94
    %98 = vmatprep.subr.bf16.mxu0 0
    %99 = vmatpush1.bf16.msra.mxu0 0
    %100 = vmatprep.subr.bf16.mxu0 0
    %101 = vmatpush1.bf16.msra.mxu0 0
    %102 = vmatprep.subr.bf16.mxu0 0
    %103 = vmatpush1.bf16.msra.mxu0 0
    %104 = vmatprep.subr.bf16.mxu0 0
    %105 = vmatpush1.bf16.msra.mxu0 0
    %106 = vmatprep.subr.bf16.mxu0 0
    %107 = vmatpush1.bf16.msra.mxu0 0
    %108 = vmatprep.subr.bf16.mxu0 0
    %109 = vmatpush1.bf16.msra.mxu0 0
    %110 = vmatprep.subr.bf16.mxu0 0
    %111 = vmatpush1.bf16.msra.mxu0 0
    %112 = vmatprep.subr.bf16.mxu0 0
    %113 = vmatpush1.bf16.msra.mxu0 0
    %114 = vmatprep.subr.bf16.mxu0 0
    %115 = vmatpush1.bf16.msra.mxu0 0
    %116 = vmatprep.subr.bf16.mxu0 0
    %117 = vmatpush1.bf16.msra.mxu0 0
    %118 = vmatprep.subr.bf16.mxu0 0
    %119 = vmatpush1.bf16.msra.mxu0 0
    %120 = vmatprep.subr.bf16.mxu0 0
    %121 = vmatpush1.bf16.msra.mxu0 0
    %122 = vmatprep.subr.bf16.mxu0 0
    %123 = vmatpush1.bf16.msra.mxu0 0
    %124 = vmatprep.subr.bf16.mxu0 0
    %125 = vmatpush1.bf16.msra.mxu0 0
    %126 = vmatprep.subr.bf16.mxu0 0
    %127 = vmatpush1.bf16.msra.mxu0 0
    %128 = vmatprep.mubr.bf16.mxu0 0
    %129 = vmatmul.mubr.bf16.gmra.mrb[0].mxu0 %v90
    %v130 = vpop.f32.mrb[0].mxu0
    %v131 = vadd.f32 %v86, %v130
    %v132 = vpop.f32.mrb[0].mxu0
    %v133 = vpop.f32.mrb[0].mxu0
    %v134 = vpop.f32.mrb[0].mxu0
    %135 = vdwg.mxu0
    %v136 = vmax.f32 %v131, 0.0
    %v137 = vpack.c.bf16 %v136, %v136
    %v138 = vld [vmem:[#allocation6] sm:$0xf]
    %v139 = vld [vmem:[#allocation6 + $0x4] sm:$0xf]
    %v140 = vld [vmem:[#allocation6 + $0x8] sm:$0xf]
    %v141 = vld [vmem:[#allocation6 + $0xc] sm:$0xf]
    %v142 = vld [vmem:[#allocation6 + $0x10] sm:$0xf]
    %v143 = vld [vmem:[#allocation6 + $0x14] sm:$0xf]
    %v144 = vld [vmem:[#allocation6 + $0x18] sm:$0xf]
    %v145 = vld [vmem:[#allocation6 + $0x1c] sm:$0xf]
    %v146 = vld [vmem:[#allocation6 + $0x20] sm:$0xf]
    %v147 = vld [vmem:[#allocation6 + $0x24] sm:$0xf]
    %v148 = vld [vmem:[#allocation6 + $0x28] sm:$0xf]
    %v149 = vld [vmem:[#allocation6 + $0x2c] sm:$0xf]
    %v150 = vld [vmem:[#allocation6 + $0x30] sm:$0xf]
    %v151 = vld [vmem:[#allocation6 + $0x34] sm:$0xf]
    %v152 = vld [vmem:[#allocation6 + $0x38] sm:$0xf]
    %v153 = vld [vmem:[#allocation6 + $0x3c] sm:$0xf]
    %v154 = vld [vmem:[%s4] sm:$0x1]
    %v156 = vlaneseq
    %v157 = vshrl.u32 %v156, 7
    %v158 = vsub.s32 0, %v157
    %v159 = vrot.slane %v154, %v158
    %v177 = vunpack.c.l.b16 %v138
    %v178 = vunpack.c.l.b16 %v139
    %v179 = vunpack.c.l.b16 %v140
    %v180 = vunpack.c.l.b16 %v141
    %v181 = vunpack.c.l.b16 %v142
    %v182 = vunpack.c.l.b16 %v143
    %v183 = vunpack.c.l.b16 %v144
    %v184 = vunpack.c.l.b16 %v145
    %v185 = vunpack.c.l.b16 %v146
    %v186 = vunpack.c.l.b16 %v147
    %v187 = vunpack.c.l.b16 %v148
    %v188 = vunpack.c.l.b16 %v149
    %v189 = vunpack.c.l.b16 %v150
    %v190 = vunpack.c.l.b16 %v151
    %v191 = vunpack.c.l.b16 %v152
    %v192 = vunpack.c.l.b16 %v153
    %v193 = vpack.c.b16 %v178, %v177
    %v194 = vpack.c.b16 %v180, %v179
    %v195 = vpack.c.b16 %v182, %v181
    %v196 = vpack.c.b16 %v184, %v183
    %v197 = vpack.c.b16 %v186, %v185
    %v198 = vpack.c.b16 %v188, %v187
    %v199 = vpack.c.b16 %v190, %v189
    %v200 = vpack.c.b16 %v192, %v191
    %209 = vmatprep.subr.bf16.mxu0 0
    %210 = vmatpush1.bf16.msra.mxu0 %v193
    %211 = vmatprep.subr.bf16.mxu0 0
    %212 = vmatpush1.bf16.msra.mxu0 %v194
    %213 = vmatprep.subr.bf16.mxu0 0
    %214 = vmatpush1.bf16.msra.mxu0 %v195
    %215 = vmatprep.subr.bf16.mxu0 0
    %216 = vmatpush1.bf16.msra.mxu0 %v196
    %217 = vmatprep.subr.bf16.mxu0 0
    %218 = vmatpush1.bf16.msra.mxu0 %v197
    %219 = vmatprep.subr.bf16.mxu0 0
    %220 = vmatpush1.bf16.msra.mxu0 %v198
    %221 = vmatprep.subr.bf16.mxu0 0
    %222 = vmatpush1.bf16.msra.mxu0 %v199
    %223 = vmatprep.subr.bf16.mxu0 0
    %224 = vmatpush1.bf16.msra.mxu0 %v200
    %225 = vmatprep.subr.bf16.mxu0 0
    %226 = vmatpush1.bf16.msra.mxu0 0
    %227 = vmatprep.subr.bf16.mxu0 0
    %228 = vmatpush1.bf16.msra.mxu0 0
    %229 = vmatprep.subr.bf16.mxu0 0
    %230 = vmatpush1.bf16.msra.mxu0 0
    %231 = vmatprep.subr.bf16.mxu0 0
    %232 = vmatpush1.bf16.msra.mxu0 0
    %233 = vmatprep.subr.bf16.mxu0 0
    %234 = vmatpush1.bf16.msra.mxu0 0
    %235 = vmatprep.subr.bf16.mxu0 0
    %236 = vmatpush1.bf16.msra.mxu0 0
    %237 = vmatprep.subr.bf16.mxu0 0
    %238 = vmatpush1.bf16.msra.mxu0 0
    %239 = vmatprep.subr.bf16.mxu0 0
    %240 = vmatpush1.bf16.msra.mxu0 0
    %241 = vmatprep.mubr.bf16.mxu0 0
    %242 = vmatmul.mubr.bf16.gmra.mrb[0].mxu0 %v137
    %v243 = vpop.f32.mrb[0].mxu0
    %v244 = vadd.f32 %v159, %v243
    %v245 = vpop.f32.mrb[0].mxu0
    %v246 = vpop.f32.mrb[0].mxu0
    %v247 = vpop.f32.mrb[0].mxu0
    %248 = vdwg.mxu0
    %v249 = vmax.f32 %v244, 0.0
    %v250 = vpack.c.bf16 %v249, %v249
    %v251 = vld [vmem:[#allocation7] sm:$0xf]
    %v252 = vld [vmem:[#allocation7 + $0x4] sm:$0xf]
    %v253 = vld [vmem:[#allocation7 + $0x8] sm:$0xf]
    %v254 = vld [vmem:[#allocation7 + $0xc] sm:$0xf]
    %v255 = vld [vmem:[#allocation7 + $0x10] sm:$0xf]
    %v256 = vld [vmem:[#allocation7 + $0x14] sm:$0xf]
    %v257 = vld [vmem:[#allocation7 + $0x18] sm:$0xf]
    %v258 = vld [vmem:[#allocation7 + $0x1c] sm:$0xf]
    %v259 = vld [vmem:[#allocation7 + $0x20] sm:$0xf]
    %v260 = vld [vmem:[#allocation7 + $0x24] sm:$0xf]
    %v261 = vld [vmem:[#allocation7 + $0x28] sm:$0xf]
    %v262 = vld [vmem:[#allocation7 + $0x2c] sm:$0xf]
    %v263 = vld [vmem:[#allocation7 + $0x30] sm:$0xf]
    %v264 = vld [vmem:[#allocation7 + $0x34] sm:$0xf]
    %v265 = vld [vmem:[#allocation7 + $0x38] sm:$0xf]
    %v266 = vld [vmem:[#allocation7 + $0x3c] sm:$0xf]
    %v283 = vunpack.c.l.b16 %v251
    %v284 = vunpack.c.l.b16 %v252
    %v285 = vunpack.c.l.b16 %v253
    %v286 = vunpack.c.l.b16 %v254
    %v287 = vunpack.c.l.b16 %v255
    %v288 = vunpack.c.l.b16 %v256
    %v289 = vunpack.c.l.b16 %v257
    %v290 = vunpack.c.l.b16 %v258
    %v291 = vunpack.c.l.b16 %v259
    %v292 = vunpack.c.l.b16 %v260
    %v293 = vunpack.c.l.b16 %v261
    %v294 = vunpack.c.l.b16 %v262
    %v295 = vunpack.c.l.b16 %v263
    %v296 = vunpack.c.l.b16 %v264
    %v297 = vunpack.c.l.b16 %v265
    %v298 = vunpack.c.l.b16 %v266
    %v299 = vpack.c.b16 %v284, %v283
    %v300 = vpack.c.b16 %v286, %v285
    %v301 = vpack.c.b16 %v288, %v287
    %v302 = vpack.c.b16 %v290, %v289
    %v303 = vpack.c.b16 %v292, %v291
    %v304 = vpack.c.b16 %v294, %v293
    %v305 = vpack.c.b16 %v296, %v295
    %v306 = vpack.c.b16 %v298, %v297
    %315 = vmatprep.subr.bf16.mxu0 0
    %316 = vmatpush1.bf16.msra.mxu0 %v299
    %317 = vmatprep.subr.bf16.mxu0 0
    %318 = vmatpush1.bf16.msra.mxu0 %v300
    %319 = vmatprep.subr.bf16.mxu0 0
    %320 = vmatpush1.bf16.msra.mxu0 %v301
    %321 = vmatprep.subr.bf16.mxu0 0
    %322 = vmatpush1.bf16.msra.mxu0 %v302
    %323 = vmatprep.subr.bf16.mxu0 0
    %324 = vmatpush1.bf16.msra.mxu0 %v303
    %325 = vmatprep.subr.bf16.mxu0 0
    %326 = vmatpush1.bf16.msra.mxu0 %v304
    %327 = vmatprep.subr.bf16.mxu0 0
    %328 = vmatpush1.bf16.msra.mxu0 %v305
    %329 = vmatprep.subr.bf16.mxu0 0
    %330 = vmatpush1.bf16.msra.mxu0 %v306
    %331 = vmatprep.subr.bf16.mxu0 0
    %332 = vmatpush1.bf16.msra.mxu0 0
    %333 = vmatprep.subr.bf16.mxu0 0
    %334 = vmatpush1.bf16.msra.mxu0 0
    %335 = vmatprep.subr.bf16.mxu0 0
    %336 = vmatpush1.bf16.msra.mxu0 0
    %337 = vmatprep.subr.bf16.mxu0 0
    %338 = vmatpush1.bf16.msra.mxu0 0
    %339 = vmatprep.subr.bf16.mxu0 0
    %340 = vmatpush1.bf16.msra.mxu0 0
    %341 = vmatprep.subr.bf16.mxu0 0
    %342 = vmatpush1.bf16.msra.mxu0 0
    %343 = vmatprep.subr.bf16.mxu0 0
    %344 = vmatpush1.bf16.msra.mxu0 0
    %345 = vmatprep.subr.bf16.mxu0 0
    %346 = vmatpush1.bf16.msra.mxu0 0
    %347 = vmatprep.mubr.bf16.mxu0 0
    %348 = vmatmul.mubr.bf16.gmra.mrb[0].mxu0 %v250
    %v349 = vpop.f32.mrb[0].mxu0
    %v350 = vadd.f32 0.0, %v349
    %v351 = vpop.f32.mrb[0].mxu0
    %v352 = vpop.f32.mrb[0].mxu0
    %v353 = vpop.f32.mrb[0].mxu0
    %354 = vdwg.mxu0
    %v355 = vld [vmem:[%s6] sm:$0x1]
    %v357 = vlaneseq
    %v358 = vshrl.u32 %v357, 7
    %v359 = vsub.s32 0, %v358
    %v360 = vrot.slane %v355, %v359
    %v362 = vadd.f32 %v350, %v360
    %vm363 = vcmask 31744
    %364 = vst.msk [vmem:[%s7] sm:$0xff] %vm363, %v362
    // Predicated region
    $region46: #{tpu_custom_call.1} parent=1 // pred_check
      _
    $region47: #{tpu_custom_call.1} parent=1 // pred_check_branch
      %366 = sbr.rel (0) target = $region49
    $region48: #{tpu_custom_call.1} parent=1 // pred_region
      _
    $region49: #{tpu_custom_call.1} parent=1 // pred_fallthru
      _
    // Predicated region
    $region50: #{tpu_custom_call.1} parent=1 // pred_check
      _
    $region51: #{tpu_custom_call.1} parent=1 // pred_check_branch
      %368 = sbr.rel (0) target = $region53
    $region52: #{tpu_custom_call.1} parent=1 // pred_region
      _
    $region53: #{tpu_custom_call.1} parent=1 // pred_fallthru
      _
    %369 = vsyncpa [#allocation3], 1
    %370 = vsyncpa [#allocation5], 1
    %371 = vsyncpa [#allocation8], 1

</llo_original>
